<compile_context>
chip_gen: v7x
topology: tpu7x:2x2x1
jax: 0.10.0
libtpu: 0.0.40
codegen_flags: <defaults>
</compile_context>

<pallas_src>
import functools

import jax
import jax.numpy as jnp
from jax.experimental import pallas as pl
from jax.experimental.pallas import tpu as pltpu


def _cdiv(a, b):
    return (a + b - 1) // b


def _round_up(x, m):
    return _cdiv(x, m) * m


def _focal_loss_kernel(alpha_ref, pred_ref, tgt_ref, out_ref, *, n_classes, gamma):
    # alpha_ref: (C,)                 f32 SMEM (scalar prefetch)
    # pred_ref : (C, tile_rows, 128)  logits VMEM (input dtype; cast to f32 here)
    # tgt_ref  : (tile_rows, 128)     i32 VMEM
    # out_ref  : (1, 8, 128)          f32 VMEM -- per-parallel-chunk partial sum,
    #                                 resident across the inner (reduction) grid axis.
    step = pl.program_id(1)

    @pl.when(step == 0)
    def _():
        out_ref[...] = jnp.zeros_like(out_ref)

    tgt = tgt_ref[...]                                            # (tile_rows, 128) i32

    # Full-vreg class rows (classes unrolled; C is tiny).
    rows = [pred_ref[c].astype(jnp.float32) for c in range(n_classes)]

    # Max over classes: VPU maximum chain (no cross-lane reduce).
    m = rows[0]
    for c in range(1, n_classes):
        m = jnp.maximum(m, rows[c])

    zero = jnp.zeros_like(m)
    sum_exp = zero
    shifted_t = zero      # pred[target] - m
    alpha_t = zero        # alpha[target]; stays 0 for padded (target == C) columns
    for c in range(n_classes):
        shifted = rows[c] - m
        sum_exp = sum_exp + jnp.exp(shifted)
        is_c = tgt == c
        shifted_t = shifted_t + jnp.where(is_c, shifted, 0.0)
        alpha_t = alpha_t + jnp.where(is_c, alpha_ref[c], 0.0)

    lse = jnp.log(sum_exp)
    ce = lse - shifted_t                                          # = -logpt
    pt = jnp.exp(-ce)                                             # softmax prob of target (EUP)

    one_m_pt = 1.0 - pt
    if isinstance(gamma, int) or float(gamma).is_integer():
        g = int(gamma)
        if g == 2:
            pow_term = one_m_pt * one_m_pt                        # pure VPU
        elif g == 1:
            pow_term = one_m_pt
        elif g == 0:
            pow_term = jnp.ones_like(one_m_pt)
        else:
            pow_term = one_m_pt ** g                              # integer_pow -> VPU
    else:
        # Clamp: rounding can make pt marginally > 1; negative base ** non-int -> NaN.
        pow_term = jnp.maximum(one_m_pt, 0.0) ** gamma

    focal = alpha_t * pow_term * ce                               # padded cols contribute 0

    # Collapse the tile's vregs with plain VPU adds into the resident (1,8,128) block.
    tr = focal.shape[0]
    out_ref[...] += focal.reshape(tr // 8, 8, 128).sum(axis=0)[None]


def multi_class_focal_loss_with_alpha(pred, target,
                                      alpha=(0.51, 0.002, 0.488),
                                      gamma=2,
                                      reduction="mean",
                                      tile_n=131072,
                                      num_parallel=2):
    """Pallas TPU implementation of MultiClassFocalLossWithAlpha.forward.

    pred: (N, C) float array of logits; target: (N,) int class ids.
    """
    assert reduction in ("mean", "sum"), \
        "only 'mean' and 'sum' reductions are implemented in-kernel"
    # TODO(synk): reduction='none' (per-sample vector output) is not implemented.

    n, c = pred.shape
    alpha_arr = jnp.asarray(alpha, dtype=jnp.float32).reshape(c)

    # ---- Layout / tiling: batch fills lanes (128) AND sublanes (tile_rows). ----
    n128 = _cdiv(n, 128)                                    # batch rows of 128 samples
    p = num_parallel if (num_parallel > 1 and n128 >= 2 * 8) else 1
    rows_per_chunk = _cdiv(n128, p)

    default_tile_rows = max(8, _round_up(_cdiv(int(tile_n), 128), 8))
    tile_rows = min(default_tile_rows, _round_up(rows_per_chunk, 8))
    tiles_per_chunk = _cdiv(rows_per_chunk, tile_rows)
    # Re-balance so the required padding is at most a few sublane-groups per tile.
    tile_rows = _round_up(_cdiv(rows_per_chunk, tiles_per_chunk), 8)
    rows_cov = p * tiles_per_chunk * tile_rows               # total 128-sample rows covered
    n_pad = rows_cov * 128

    # Keep input dtype (no upcast before the DMA); cast to f32 inside the kernel.
    pred_t = jnp.transpose(pred)                                          # (C, N)
    pred_t = jnp.pad(pred_t, ((0, 0), (0, n_pad - n)))                    # zero pad: finite
    pred_t = pred_t.reshape(c, rows_cov, 128)
    tgt2 = jnp.pad(target.astype(jnp.int32), (0, n_pad - n),
                   constant_values=c).reshape(rows_cov, 128)              # id==C => masked

    divisor = n if reduction == "mean" else 1
    pred_bytes = jnp.dtype(pred.dtype).itemsize

    block_bytes = (c * tile_rows * 128 * pred_bytes) + (tile_rows * 128 * 4)
    vmem_limit = min(max(2 * block_bytes + (4 << 20), 8 << 20), 96 << 20)

    cost = pl.CostEstimate(
        flops=(8 * c + 12) * n_pad,
        transcendentals=(c + 2) * n_pad,                 # C exps + log + exp(-ce) / sample
        bytes_accessed=(c * pred_bytes + 4) * n_pad + 4 * c + p * 8 * 128 * 4,
    )

    out = pl.pallas_call(
        functools.partial(_focal_loss_kernel, n_classes=c, gamma=gamma),
        out_shape=jax.ShapeDtypeStruct((p, 8, 128), jnp.float32),
        grid_spec=pltpu.PrefetchScalarGridSpec(
            num_scalar_prefetch=1,                       # alpha -> SMEM scalars
            grid=(p, tiles_per_chunk),
            in_specs=[
                pl.BlockSpec((c, tile_rows, 128),
                             lambda pi, i, a: (0, pi * tiles_per_chunk + i, 0)),
                pl.BlockSpec((tile_rows, 128),
                             lambda pi, i, a: (pi * tiles_per_chunk + i, 0)),
            ],
            out_specs=pl.BlockSpec((1, 8, 128), lambda pi, i, a: (pi, 0, 0)),
        ),
        compiler_params=pltpu.CompilerParams(
            dimension_semantics=("parallel", "arbitrary"),   # chunks across cores, seq reduce
            vmem_limit_bytes=int(vmem_limit)),
        cost_estimate=cost,
    )(alpha_arr, pred_t, tgt2)

    # Tiny final reduction + normalization on the (P, 8, 128) partials.
    return jnp.sum(out) / jnp.float32(divisor)


def _reference_focal_loss(pred, target, alpha, gamma=2, reduction="mean"):
    # Pure-JAX reference mirroring the PyTorch forward.
    alpha_arr = jnp.asarray(alpha, dtype=jnp.float32)
    log_sm = jax.nn.log_softmax(pred.astype(jnp.float32), axis=1)
    logpt = jnp.take_along_axis(log_sm, target.reshape(-1, 1), axis=1).reshape(-1)
    ce = -logpt
    pt = jnp.exp(logpt)
    a = alpha_arr[target]
    fl = a * (1.0 - pt) ** gamma * ce
    return jnp.mean(fl) if reduction == "mean" else jnp.sum(fl)


if __name__ == "__main__":
    key = jax.random.PRNGKey(0)
    k_pred, k_tgt, k_pred2, k_tgt2 = jax.random.split(key, 4)
    alpha = (0.51, 0.002, 0.488)

    # Small case: batch of 8 samples, 3 classes (matches the module's default alpha).
    N, C = 8, 3
    pred = jax.random.normal(k_pred, (N, C), dtype=jnp.float32)
    target = jax.random.randint(k_tgt, (N,), 0, C, dtype=jnp.int32)
    loss = jax.block_until_ready(
        multi_class_focal_loss_with_alpha(pred, target, alpha=alpha, gamma=2,
                                          reduction="mean"))
    ref = jax.block_until_ready(_reference_focal_loss(pred, target, alpha, gamma=2))
    assert jnp.allclose(loss, ref, rtol=3e-3, atol=1e-5), (loss, ref)

    # Same small case, 'sum' reduction.
    loss_s = jax.block_until_ready(
        multi_class_focal_loss_with_alpha(pred, target, alpha=alpha, gamma=2,
                                          reduction="sum"))
    ref_s = jax.block_until_ready(
        _reference_focal_loss(pred, target, alpha, gamma=2, reduction="sum"))
    assert jnp.allclose(loss_s, ref_s, rtol=3e-3, atol=1e-5), (loss_s, ref_s)

    # Multi-tile / multi-chunk case: exercises the parallel chunk axis (P=2), grid
    # accumulation over several inner steps, and ragged-tail padding/masking.
    N2 = 40000
    pred2 = jax.random.normal(k_pred2, (N2, C), dtype=jnp.float32)
    target2 = jax.random.randint(k_tgt2, (N2,), 0, C, dtype=jnp.int32)
    loss2 = jax.block_until_ready(
        multi_class_focal_loss_with_alpha(pred2, target2, alpha=alpha, gamma=2,
                                          reduction="mean", tile_n=8192))
    ref2 = jax.block_until_ready(_reference_focal_loss(pred2, target2, alpha, gamma=2))
    assert jnp.allclose(loss2, ref2, rtol=3e-3, atol=1e-5), (loss2, ref2)

    print("KERNEL_OK")
</pallas_src>

<mosaic_0001>
module attributes {stable_mosaic.version = 11 : i64} {
  func.func @_focal_loss_kernel(%arg0: i32, %arg1: i32, %arg2: memref<3xf32, #tpu.memory_space<smem>>, %arg3: memref<3x8x128xf32, #tpu.memory_space<vmem>>, %arg4: memref<8x128xi32, #tpu.memory_space<vmem>>, %arg5: memref<1x8x128xf32, #tpu.memory_space<vmem>>) attributes {dimension_semantics = [#tpu.dimension_semantics<parallel>, #tpu.dimension_semantics<arbitrary>], iteration_bounds = array<i64: 1, 1>, scalar_prefetch = 1 : i64, scratch_operands = 0 : i64, tpu.core_type = #tpu.core_type<tc>, window_params = [{transform_indices = @transform_0, window_bounds = array<i64: 3, 8, 128>}, {transform_indices = @transform_1, window_bounds = array<i64: 8, 128>}, {transform_indices = @transform_2, window_bounds = array<i64: 1, 8, 128>}]} {
    %c0_i32 = arith.constant 0 : i32
    %0 = arith.cmpi eq, %arg1, %c0_i32 : i32
    %1 = arith.extui %0 : i1 to i32
    %c0_i32_0 = arith.constant 0 : i32
    %2 = arith.cmpi ne, %1, %c0_i32_0 : i32
    scf.if %2 {
      %cst_28 = arith.constant 0.000000e+00 : f32
      %68 = vector.broadcast %cst_28 : f32 to vector<1x8x128xf32>
      %c0_29 = arith.constant 0 : index
      %c0_30 = arith.constant 0 : index
      %c0_31 = arith.constant 0 : index
      %69 = vector.load %arg5[%c0_29, %c0_30, %c0_31] : memref<1x8x128xf32, #tpu.memory_space<vmem>>, vector<1x8x128xf32>
      tpu.vector_store %arg5[%c0_29, %c0_30, %c0_31], %68 {strides = array<i32>} : memref<1x8x128xf32, #tpu.memory_space<vmem>>, vector<1x8x128xf32>,
    } else {
    }
    %c0 = arith.constant 0 : index
    %c0_1 = arith.constant 0 : index
    %3 = vector.load %arg4[%c0, %c0_1] : memref<8x128xi32, #tpu.memory_space<vmem>>, vector<8x128xi32>
    %c0_2 = arith.constant 0 : index
    %c0_3 = arith.constant 0 : index
    %c0_4 = arith.constant 0 : index
    %4 = vector.load %arg3[%c0_2, %c0_3, %c0_4] : memref<3x8x128xf32, #tpu.memory_space<vmem>>, vector<1x8x128xf32>
    %5 = vector.shape_cast %4 : vector<1x8x128xf32> to vector<8x128xf32>
    %c1 = arith.constant 1 : index
    %c0_5 = arith.constant 0 : index
    %c0_6 = arith.constant 0 : index
    %6 = vector.load %arg3[%c1, %c0_5, %c0_6] : memref<3x8x128xf32, #tpu.memory_space<vmem>>, vector<1x8x128xf32>
    %7 = vector.shape_cast %6 : vector<1x8x128xf32> to vector<8x128xf32>
    %c2 = arith.constant 2 : index
    %c0_7 = arith.constant 0 : index
    %c0_8 = arith.constant 0 : index
    %8 = vector.load %arg3[%c2, %c0_7, %c0_8] : memref<3x8x128xf32, #tpu.memory_space<vmem>>, vector<1x8x128xf32>
    %9 = vector.shape_cast %8 : vector<1x8x128xf32> to vector<8x128xf32>
    %10 = arith.maximumf %5, %7 : vector<8x128xf32>
    %11 = arith.maximumf %10, %9 : vector<8x128xf32>
    %cst = arith.constant 0.000000e+00 : f32
    %12 = vector.broadcast %cst : f32 to vector<8x128xf32>
    %13 = arith.subf %5, %11 : vector<8x128xf32>
    %14 = math.exp %13 : vector<8x128xf32>
    %15 = arith.addf %12, %14 : vector<8x128xf32>
    %c0_i32_9 = arith.constant 0 : i32
    %16 = vector.broadcast %c0_i32_9 : i32 to vector<8x128xi32>
    %17 = arith.cmpi eq, %3, %16 : vector<8x128xi32>
    %cst_10 = arith.constant 0.000000e+00 : f32
    %18 = vector.broadcast %cst_10 : f32 to vector<8x128xf32>
    %19 = arith.select %17, %13, %18 : vector<8x128xi1>, vector<8x128xf32>
    %20 = arith.addf %12, %19 : vector<8x128xf32>
    %c0_11 = arith.constant 0 : index
    %21 = memref.load %arg2[%c0_11] : memref<3xf32, #tpu.memory_space<smem>>
    %cst_12 = arith.constant 0.000000e+00 : f32
    %22 = vector.broadcast %21 : f32 to vector<8x128xf32>
    %23 = vector.broadcast %cst_12 : f32 to vector<8x128xf32>
    %24 = arith.select %17, %22, %23 : vector<8x128xi1>, vector<8x128xf32>
    %25 = arith.addf %12, %24 : vector<8x128xf32>
    %26 = arith.subf %7, %11 : vector<8x128xf32>
    %27 = math.exp %26 : vector<8x128xf32>
    %28 = arith.addf %15, %27 : vector<8x128xf32>
    %c1_i32 = arith.constant 1 : i32
    %29 = vector.broadcast %c1_i32 : i32 to vector<8x128xi32>
    %30 = arith.cmpi eq, %3, %29 : vector<8x128xi32>
    %cst_13 = arith.constant 0.000000e+00 : f32
    %31 = vector.broadcast %cst_13 : f32 to vector<8x128xf32>
    %32 = arith.select %30, %26, %31 : vector<8x128xi1>, vector<8x128xf32>
    %33 = arith.addf %20, %32 : vector<8x128xf32>
    %c1_14 = arith.constant 1 : index
    %34 = memref.load %arg2[%c1_14] : memref<3xf32, #tpu.memory_space<smem>>
    %cst_15 = arith.constant 0.000000e+00 : f32
    %35 = vector.broadcast %34 : f32 to vector<8x128xf32>
    %36 = vector.broadcast %cst_15 : f32 to vector<8x128xf32>
    %37 = arith.select %30, %35, %36 : vector<8x128xi1>, vector<8x128xf32>
    %38 = arith.addf %25, %37 : vector<8x128xf32>
    %39 = arith.subf %9, %11 : vector<8x128xf32>
    %40 = math.exp %39 : vector<8x128xf32>
    %41 = arith.addf %28, %40 : vector<8x128xf32>
    %c2_i32 = arith.constant 2 : i32
    %42 = vector.broadcast %c2_i32 : i32 to vector<8x128xi32>
    %43 = arith.cmpi eq, %3, %42 : vector<8x128xi32>
    %cst_16 = arith.constant 0.000000e+00 : f32
    %44 = vector.broadcast %cst_16 : f32 to vector<8x128xf32>
    %45 = arith.select %43, %39, %44 : vector<8x128xi1>, vector<8x128xf32>
    %46 = arith.addf %33, %45 : vector<8x128xf32>
    %c2_17 = arith.constant 2 : index
    %47 = memref.load %arg2[%c2_17] : memref<3xf32, #tpu.memory_space<smem>>
    %cst_18 = arith.constant 0.000000e+00 : f32
    %48 = vector.broadcast %47 : f32 to vector<8x128xf32>
    %49 = vector.broadcast %cst_18 : f32 to vector<8x128xf32>
    %50 = arith.select %43, %48, %49 : vector<8x128xi1>, vector<8x128xf32>
    %51 = arith.addf %38, %50 : vector<8x128xf32>
    %52 = math.log %41 : vector<8x128xf32>
    %53 = arith.subf %52, %46 : vector<8x128xf32>
    %cst_19 = arith.constant 0.000000e+00 : f32
    %54 = vector.broadcast %cst_19 : f32 to vector<8x128xf32>
    %55 = arith.subf %54, %53 : vector<8x128xf32>
    %56 = math.exp %55 : vector<8x128xf32>
    %cst_20 = arith.constant 1.000000e+00 : f32
    %57 = vector.broadcast %cst_20 : f32 to vector<8x128xf32>
    %58 = arith.subf %57, %56 : vector<8x128xf32>
    %59 = arith.mulf %58, %58 : vector<8x128xf32>
    %60 = arith.mulf %51, %59 : vector<8x128xf32>
    %61 = arith.mulf %60, %53 : vector<8x128xf32>
    %c0_21 = arith.constant 0 : index
    %c0_22 = arith.constant 0 : index
    %c0_23 = arith.constant 0 : index
    %62 = vector.load %arg5[%c0_21, %c0_22, %c0_23] : memref<1x8x128xf32, #tpu.memory_space<vmem>>, vector<1x8x128xf32>
    %63 = vector.shape_cast %61 : vector<8x128xf32> to vector<1x8x128xf32>
    %cst_24 = arith.constant dense<0.000000e+00> : vector<8x128xf32>
    %64 = vector.multi_reduction <add>, %63, %cst_24 [0] : vector<1x8x128xf32> to vector<8x128xf32>
    %65 = vector.shape_cast %64 : vector<8x128xf32> to vector<1x8x128xf32>
    %66 = arith.addf %62, %65 : vector<1x8x128xf32>
    %c0_25 = arith.constant 0 : index
    %c0_26 = arith.constant 0 : index
    %c0_27 = arith.constant 0 : index
    %67 = vector.load %arg5[%c0_25, %c0_26, %c0_27] : memref<1x8x128xf32, #tpu.memory_space<vmem>>, vector<1x8x128xf32>
    tpu.vector_store %arg5[%c0_25, %c0_26, %c0_27], %66 {strides = array<i32>} : memref<1x8x128xf32, #tpu.memory_space<vmem>>, vector<1x8x128xf32>,
    return
  }
  func.func @transform_0(%arg0: i32, %arg1: i32, %arg2: memref<3xf32, #tpu.memory_space<smem>>) -> (i32, i32, i32) {
    %c1_i32 = arith.constant 1 : i32
    %0 = arith.muli %arg0, %c1_i32 : i32
    %1 = arith.addi %0, %arg1 : i32
    %c0_i32 = arith.constant 0 : i32
    %c0_i32_0 = arith.constant 0 : i32
    %c0_i32_1 = arith.constant 0 : i32
    return %c0_i32, %1, %c0_i32_0 : i32, i32, i32
  }
  func.func @transform_1(%arg0: i32, %arg1: i32, %arg2: memref<3xf32, #tpu.memory_space<smem>>) -> (i32, i32) {
    %c1_i32 = arith.constant 1 : i32
    %0 = arith.muli %arg0, %c1_i32 : i32
    %1 = arith.addi %0, %arg1 : i32
    %c0_i32 = arith.constant 0 : i32
    %c0_i32_0 = arith.constant 0 : i32
    return %1, %c0_i32 : i32, i32
  }
  func.func @transform_2(%arg0: i32, %arg1: i32, %arg2: memref<3xf32, #tpu.memory_space<smem>>) -> (i32, i32, i32) {
    %c0_i32 = arith.constant 0 : i32
    %c0_i32_0 = arith.constant 0 : i32
    %c0_i32_1 = arith.constant 0 : i32
    return %arg0, %c0_i32, %c0_i32_0 : i32, i32, i32
  }
}

</mosaic_0001>

<llo_original>
// kernel: tpu_custom_call.1
$region0: #{tpu_custom_call.1}
  #allocation0 [shape = 'u32[]', space=smem, size = 0x4, offset = 0x4, fixed_abs, tag = 'smem constant byte address 0x4 - core index']
  #allocation1 [shape = 'u32[144,128]{1,0:T(1,128)}', space=vmem, size = 0x12000, scoped, tag = 'internal scratch']
  #allocation2 [shape = 's32[1]{0}', space=sflag, size = 0x4, scoped, tag = 'scoped memory for tpu_custom_call.1']
  #allocation3 [shape = 'u8[512]{0}', space=smem, size = 0x200, scoped, tag = 'prefetched SMEM operand 0']
  %s0 = inlined_call_operand.hbm [shape: f32[3], index: 0, kind: input, shape index: {}]
  %s1 = inlined_call_operand.hbm [shape: f32[3,8,128], index: 1, kind: input, shape index: {}]
  %s2 = inlined_call_operand.hbm [shape: s32[8,128], index: 2, kind: input, shape index: {}]
  %s3 = inlined_call_operand.hbm [shape: f32[1,8,128], index: 3, kind: output, shape index: {}]
  %s4 = sld [smem:[#allocation0]]
  $region30: #{tpu_custom_call.1} parent=0
    _
  %s6 = ssub.s32 1, %s4
  %s7 = scalar_select 0, %s6, %s4
  %9 = dma.hbm_to_smem %s0, 16, [#allocation3], [#allocation2]
  %10 = dma.done [#allocation2], 16
  %11 = sfence
  $region1: #{tpu_custom_call.1} parent=0
    #allocation4 [shape = 'u8[12288]{0}', space=vmem, size = 0x3000, scoped, tag = 'input window, operand 1, single buffered']
    #allocation5 [shape = 's32[1]{0}', space=sflag, size = 0x4, scoped, tag = 'scoped memory for tpu_custom_call.1']
    #allocation6 [shape = 's32[1]{0}', space=sflag, size = 0x4, scoped, tag = 'scoped memory for tpu_custom_call.1']
    #allocation7 [shape = 'u8[4096]{0}', space=vmem, size = 0x1000, scoped, tag = 'input window, operand 2, single buffered']
    #allocation8 [shape = 's32[1]{0}', space=sflag, size = 0x4, scoped, tag = 'scoped memory for tpu_custom_call.1']
    #allocation9 [shape = 'u8[4096]{0}', space=vmem, size = 0x1000, scoped, tag = 'output window, operand 0, single buffered']
    %12 = vsyncpa [#allocation5], 0
    %13 = vsyncpa [#allocation8], 0
    %14 = vsyncpa [#allocation6], 0
    // Predicated region
    $region2: #{tpu_custom_call.1} parent=1 // pred_check
      _
    $region3: #{tpu_custom_call.1} parent=1 // pred_check_branch
      %16 = sbr.rel (0) target = $region5
    $region4: #{tpu_custom_call.1} parent=1 // pred_region
      %s17 = sadd.s32 0, 0
      %s19 = ssub.s32 384, 384
      %20 = vsyncadd [#allocation5], %s19
      %s21 = smul.addr %s17, 128
      %s22 = scalar_lea.hbm %s1, %s21
      %s23 = sshll.u32 [#allocation4], 4
      %s24 = int_to_ptr.vmem [resolvable:$true] %s23
      %29 = dma.hbm_to_vmem [thread:$0]  %s22, 384, %s24, [#allocation5], 128, 128, 8
    $region5: #{tpu_custom_call.1} parent=1 // pred_fallthru
      _
    // Predicated region
    $region6: #{tpu_custom_call.1} parent=1 // pred_check
      _
    $region7: #{tpu_custom_call.1} parent=1 // pred_check_branch
      %31 = sbr.rel (0) target = $region9
    $region8: #{tpu_custom_call.1} parent=1 // pred_region
      %s32 = sadd.s32 0, 0
      %s34 = ssub.s32 128, 128
      %35 = vsyncadd [#allocation8], %s34
      %s36 = smul.addr %s32, 128
      %s37 = scalar_lea.hbm %s2, %s36
      %s39 = sshll.u32 [#allocation7], 4
      %s40 = int_to_ptr.vmem [resolvable:$true] %s39
      %42 = dma.hbm_to_vmem [thread:$0]  %s37, 128, %s40, [#allocation8]
    $region9: #{tpu_custom_call.1} parent=1 // pred_fallthru
      _
    // Predicated region
    $region10: #{tpu_custom_call.1} parent=1 // pred_check
      _
    $region11: #{tpu_custom_call.1} parent=1 // pred_check_branch
      %44 = sbr.rel (0) target = $region13
    $region12: #{tpu_custom_call.1} parent=1 // pred_region
      %45 = dma.done [#allocation5], 384
    $region13: #{tpu_custom_call.1} parent=1 // pred_fallthru
      _
    // Predicated region
    $region14: #{tpu_custom_call.1} parent=1 // pred_check
      _
    $region15: #{tpu_custom_call.1} parent=1 // pred_check_branch
      %47 = sbr.rel (0) target = $region17
    $region16: #{tpu_custom_call.1} parent=1 // pred_region
      %48 = dma.done [#allocation8], 128
    $region17: #{tpu_custom_call.1} parent=1 // pred_fallthru
      _
    %s49 = sadd.s32 0, 0
    %s50 = sadd.s32 0, 0
    %p51 = scmp.eq.s32.totalorder 0, 0
    // Predicated region
    $region18: #{tpu_custom_call.1} parent=1 // pred_check
      %p52 = pneg %p51
    $region19: #{tpu_custom_call.1} parent=1 // pred_check_branch
      %54 = sbr.rel (%p52) target = $region21
    $region20: #{tpu_custom_call.1} parent=1 // pred_region
      %55 = vst [vmem:[#allocation9] sm:$0xff] 0.0
    $region21: #{tpu_custom_call.1} parent=1 // pred_fallthru
      _
    %v56 = vld [vmem:[#allocation7] sm:$0xff]
    %v57 = vld [vmem:[#allocation4] sm:$0xff]
    %s58 = scalar_lea.vmem [#allocation4], 8
    %v59 = vld [vmem:[%s58] sm:$0xff]
    %s60 = scalar_lea.vmem [#allocation4], 16
    %v61 = vld [vmem:[%s60] sm:$0xff]
    %v62 = vmax.f32 %v57, %v59
    %v63 = vmax.f32 %v62, %v61
    %v64 = vsub.f32 %v57, %v63
    %v65 = vmul.f32 %v64, 1.442695
    %v66 = vpow.pop %v65
    %v67 = vadd.f32 %v66, 0.0
    %vm68 = vcmp.eq.s32.totalorder %v56, 0
    %v69 = vsel %vm68, %v64, 0.0
    %v70 = vadd.f32 %v69, 0.0
    %s71 = sld [smem:[#allocation3]]
    %v72 = vstv %s71
    %v73 = vsel %vm68, %v72, 0.0
    %v74 = vadd.f32 %v73, 0.0
    %v75 = vsub.f32 %v59, %v63
    %v76 = vmul.f32 %v75, 1.442695
    %v77 = vpow.pop %v76
    %v78 = vadd.f32 %v67, %v77
    %vm79 = vcmp.eq.s32.totalorder %v56, 1
    %v80 = vsel %vm79, %v75, 0.0
    %v81 = vadd.f32 %v70, %v80
    %s82 = sld [smem:[#allocation3 + $0x1]]
    %v83 = vstv %s82
    %v84 = vsel %vm79, %v83, 0.0
    %v85 = vadd.f32 %v74, %v84
    %v86 = vsub.f32 %v61, %v63
    %v87 = vmul.f32 %v86, 1.442695
    %v88 = vpow.pop %v87
    %v89 = vadd.f32 %v78, %v88
    %vm90 = vcmp.eq.s32.totalorder %v56, 2
    %v91 = vsel %vm90, %v86, 0.0
    %v92 = vadd.f32 %v81, %v91
    %s93 = sld [smem:[#allocation3 + $0x2]]
    %v94 = vstv %s93
    %v95 = vsel %vm90, %v94, 0.0
    %v96 = vadd.f32 %v85, %v95
    %v97 = vlog2.pop %v89
    %v98 = vmul.f32 %v97, 0.6931472
    %v99 = vsub.f32 %v98, %v92
    %v100 = vsub.f32 0.0, %v99
    %v101 = vmul.f32 %v100, 1.442695
    %v102 = vpow.pop %v101
    %v103 = vsub.f32 1.0, %v102
    %v104 = vmul.f32 %v103, %v103
    %v105 = vmul.f32 %v96, %v104
    %v106 = vmul.f32 %v105, %v99
    %v107 = vld [vmem:[#allocation9] sm:$0xff]
    %v108 = vadd.f32 %v106, 0.0
    %v109 = vadd.f32 %v107, %v108
    %110 = vst [vmem:[#allocation9] sm:$0xff] %v109
    // Predicated region
    $region22: #{tpu_custom_call.1} parent=1 // pred_check
      _
    $region23: #{tpu_custom_call.1} parent=1 // pred_check_branch
      %112 = sbr.rel (0) target = $region25
    $region24: #{tpu_custom_call.1} parent=1 // pred_region
      %s114 = ssub.s32 128, 128
      %115 = vsyncadd [#allocation6], %s114
      %s117 = sshll.u32 [#allocation9], 4
      %s118 = int_to_ptr.vmem [resolvable:$true] %s117
      %120 = dma.vmem_to_hbm [thread:$0]  %s118, 128, %s3, [#allocation6]
    $region25: #{tpu_custom_call.1} parent=1 // pred_fallthru
      _
    // Predicated region
    $region26: #{tpu_custom_call.1} parent=1 // pred_check
      _
    $region27: #{tpu_custom_call.1} parent=1 // pred_check_branch
      %122 = sbr.rel (0) target = $region29
    $region28: #{tpu_custom_call.1} parent=1 // pred_region
      %123 = dma.done [#allocation6], 128
    $region29: #{tpu_custom_call.1} parent=1 // pred_fallthru
      _
    %124 = vsyncpa [#allocation5], 1
    %125 = vsyncpa [#allocation8], 1
    %126 = vsyncpa [#allocation6], 1

</llo_original>
